<compile_context>
chip_gen: v5e
topology: v5e:2x2
jax: 0.10.0
libtpu: 0.0.40
codegen_flags: <defaults>
</compile_context>

<pallas_src>
import functools
import math

import jax
import jax.numpy as jnp
from jax.experimental import pallas as pl
from jax.experimental.pallas import tpu as pltpu


def _bert_attn_kernel(x_ref, m_ref, wst_ref, bst_ref, ws1t_ref, ws2_ref,
                      fc1w_ref, fc1b_ref, linw_ref, linb_ref, out_ref, *, r: int):
    """One batch element, fully fused.

    x_ref   : (1, n, Db)       encoder_layer slice (already cut to max_len)
    m_ref   : (1, n, 1)        sentence mask (1.0 keep / 0.0 zero-fill)
    wst_ref : (Db, Hs)         sentence_transform weight (transposed)
    bst_ref : (1, Hs)          sentence_transform bias
    ws1t_ref: (Hs, d)          Ws1[0]^T
    ws2_ref : (r, d)           Ws2[0]
    fc1w_ref: (r, Hs, mlp_d)   fc1 weight, transposed + reshaped per hop
    fc1b_ref: (1, mlp_d)
    linw_ref: (mlp_d, C)       classifier weight (transposed)
    linb_ref: (1, C)
    out_ref : (1, 1, C)        logits for this batch element
    """
    x = x_ref[0]                                            # (n, Db)
    m = m_ref[0]                                            # (n, 1)

    # masked_fill(sentence_mask == 0, 0) fused with the sentence_transform Linear.
    # TODO(synk): nn.Dropout in sentence_transform is inference-mode identity here.
    h = jnp.dot(x * m, wst_ref[...],
                preferred_element_type=jnp.float32) + bst_ref[...]      # (n, Hs)

    # A1 = tanh(Ws1 @ H^T) computed as tanh(H @ Ws1^T): (n, d)
    s = jnp.tanh(jnp.dot(h, ws1t_ref[...], preferred_element_type=jnp.float32))

    # A2 = Ws2 @ A1 produced directly in (r, n) layout -> softmax over the lane axis.
    scores = jnp.einsum('rd,nd->rn', ws2_ref[...], s,
                        preferred_element_type=jnp.float32)             # (r, n)
    scores = scores - jnp.max(scores, axis=-1, keepdims=True)
    e = jnp.exp(scores)
    a = e / jnp.sum(e, axis=-1, keepdims=True)                          # (r, n)

    # M = A @ H : (r, Hs)
    ctx = jnp.dot(a, h, preferred_element_type=jnp.float32)

    # fc1(M.view(1, r*Hs)) + ReLU, expressed as a sum over per-hop GEMMs (lane-dense).
    h1 = fc1b_ref[...]                                                  # (1, mlp_d)
    for j in range(r):
        h1 = h1 + jnp.dot(ctx[j:j + 1, :], fc1w_ref[j],
                          preferred_element_type=jnp.float32)
    h1 = jnp.maximum(h1, 0.0)

    # final classifier
    logits = jnp.dot(h1, linw_ref[...],
                     preferred_element_type=jnp.float32) + linb_ref[...]  # (1, C)
    out_ref[0] = logits.astype(out_ref.dtype)


def _bert_attn_pallas(x, m, params):
    """x: (B, n, Db) masked-input slab, m: (B, n, 1) mask. Returns (B, C) logits."""
    B, n, Db = x.shape
    wst_t = jnp.transpose(params["W_st"]).astype(jnp.float32)      # (Db, Hs)
    bst = params["b_st"].reshape(1, -1).astype(jnp.float32)        # (1, Hs)
    ws1_t = jnp.transpose(params["Ws1"]).astype(jnp.float32)       # (Hs, d)
    ws2 = params["Ws2"].astype(jnp.float32)                        # (r, d)
    r, d = ws2.shape
    Hs = wst_t.shape[1]
    fc1_w = params["W_fc1"].astype(jnp.float32)                    # (mlp_d, r*Hs)
    mlp_d = fc1_w.shape[0]
    fc1_w_r = jnp.transpose(fc1_w).reshape(r, Hs, mlp_d)           # (r, Hs, mlp_d)
    fc1_b = params["b_fc1"].reshape(1, -1).astype(jnp.float32)     # (1, mlp_d)
    lin_w_t = jnp.transpose(params["W_lin"]).astype(jnp.float32)   # (mlp_d, C)
    C = lin_w_t.shape[1]
    lin_b = params["b_lin"].reshape(1, -1).astype(jnp.float32)     # (1, C)

    kernel = functools.partial(_bert_attn_kernel, r=r)

    # Advisory cost estimate for XLA scheduling.
    flops = int(B * (2 * n * Db * Hs + 2 * n * Hs * d + 2 * r * d * n
                     + 2 * r * n * Hs + 2 * r * Hs * mlp_d + 2 * mlp_d * C))
    transcendentals = int(B * (n * d + r * n))
    weight_bytes = int(sum(int(a.size) * 4 for a in
                           (wst_t, bst, ws1_t, ws2, fc1_w_r, fc1_b, lin_w_t, lin_b)))
    bytes_accessed = int(4 * B * n * (Db + 1) + weight_bytes + 4 * B * C)
    cost = pl.CostEstimate(flops=flops, transcendentals=transcendentals,
                           bytes_accessed=bytes_accessed)

    # VMEM budget: double-buffered per-batch blocks + resident weights + headroom.
    block_bytes = 4 * (n * Db + n * 1 + C)
    vmem_limit = min(int(2 * block_bytes + weight_bytes + (8 << 20)), 64 * 1024 * 1024)

    out = pl.pallas_call(
        kernel,
        out_shape=jax.ShapeDtypeStruct((B, 1, C), jnp.float32),
        grid=(B,),
        in_specs=[
            pl.BlockSpec((1, n, Db), lambda b: (b, 0, 0)),        # x
            pl.BlockSpec((1, n, 1), lambda b: (b, 0, 0)),         # mask
            pl.BlockSpec((Db, Hs), lambda b: (0, 0)),             # W_st^T (resident)
            pl.BlockSpec((1, Hs), lambda b: (0, 0)),              # b_st
            pl.BlockSpec((Hs, d), lambda b: (0, 0)),              # Ws1^T
            pl.BlockSpec((r, d), lambda b: (0, 0)),               # Ws2
            pl.BlockSpec((r, Hs, mlp_d), lambda b: (0, 0, 0)),    # fc1 W (per hop)
            pl.BlockSpec((1, mlp_d), lambda b: (0, 0)),           # fc1 b
            pl.BlockSpec((mlp_d, C), lambda b: (0, 0)),           # lin W^T
            pl.BlockSpec((1, C), lambda b: (0, 0)),               # lin b
        ],
        out_specs=pl.BlockSpec((1, 1, C), lambda b: (b, 0, 0)),
        compiler_params=pltpu.CompilerParams(
            dimension_semantics=("parallel",),
            vmem_limit_bytes=vmem_limit),
        cost_estimate=cost,
    )(x, m, wst_t, bst, ws1_t, ws2, fc1_w_r, fc1_b, lin_w_t, lin_b)
    return out[:, 0, :]


def _sentence_mask_and_len(bert_segment):
    """Mirrors BertEncodingNetwork's mask logic (bert_segment is 0/1 segment ids)."""
    seg = bert_segment.astype(jnp.int32)
    B, T = seg.shape
    # NOTE: jnp.argmax and torch.argmax both return the FIRST max index; degenerate
    # tie-breaking inputs would be the only place they could differ historically.
    max_seg = jnp.argmax(seg, axis=-1, keepdims=True)                   # (B, 1)
    arange = jnp.arange(T, dtype=jnp.int32)[None, :]                    # (1, T)
    segment_mask = arange <= max_seg                                    # (B, T)
    sentence_mask = segment_mask & (seg == 0)                           # (B, T)
    sentence_lens = jnp.sum(sentence_mask.astype(jnp.int32), axis=1)    # (B,)
    return sentence_mask, sentence_lens


def bert_attn_forward(encoder_layer, bert_segment, params):
    """encoder_layer: (B, T, bert_size) float, bert_segment: (B, T) 0/1 ints.

    Returns logits (B, num_categories) = BertAttnNetwork.forward given the BERT output.
    """
    sentence_mask, sentence_lens = _sentence_mask_and_len(bert_segment)
    max_len = int(jnp.max(sentence_lens))        # host sync, mirrors .item() in torch
    x = encoder_layer[:, :max_len].astype(jnp.float32)                  # (B, n, Db)
    m = sentence_mask[:, :max_len].astype(jnp.float32)[..., None]       # (B, n, 1)
    return _bert_attn_pallas(x, m, params)


def init_bert_attn_params(key, bert_size, hidden_size, attn_hops, mlp_d, num_categories):
    """Deterministic init mirroring the torch module's initializers."""
    ks = jax.random.split(key, 8)
    initrange = 0.1

    def linear_init(kw, kb, fan_in, fan_out):
        bound = 1.0 / math.sqrt(fan_in)
        W = jax.random.uniform(kw, (fan_out, fan_in), jnp.float32, -bound, bound)
        b = jax.random.uniform(kb, (fan_out,), jnp.float32, -bound, bound)
        return W, b

    W_st, b_st = linear_init(ks[0], ks[1], bert_size, hidden_size)
    Ws1 = jax.random.uniform(ks[2], (mlp_d, hidden_size), jnp.float32,
                             -initrange, initrange)                 # Ws1[0]: (d, hidden)
    Ws2 = jax.random.uniform(ks[3], (attn_hops, mlp_d), jnp.float32,
                             -initrange, initrange)                 # Ws2[0]: (r, d)
    W_fc1, b_fc1 = linear_init(ks[4], ks[5], attn_hops * hidden_size, mlp_d)
    W_lin, b_lin = linear_init(ks[6], ks[7], mlp_d, num_categories)
    return dict(W_st=W_st, b_st=b_st, Ws1=Ws1, Ws2=Ws2,
                W_fc1=W_fc1, b_fc1=b_fc1, W_lin=W_lin, b_lin=b_lin)


def _ref_forward(encoder_layer, bert_segment, params):
    """Pure-JAX reference replicating the torch forward (for correctness check)."""
    sentence_mask, sentence_lens = _sentence_mask_and_len(bert_segment)
    max_len = int(jnp.max(sentence_lens))
    x = encoder_layer[:, :max_len].astype(jnp.float32)
    m = sentence_mask[:, :max_len].astype(jnp.float32)[..., None]
    B = x.shape[0]
    H = (x * m) @ params["W_st"].T + params["b_st"]                     # (B, n, Hs)
    A1 = jnp.tanh(jnp.einsum('dh,bnh->bdn', params["Ws1"], H))          # (B, d, n)
    A2 = jnp.einsum('rd,bdn->brn', params["Ws2"], A1)                   # (B, r, n)
    A = jax.nn.softmax(A2, axis=-1)
    M = jnp.einsum('brn,bnh->brh', A, H)                                # (B, r, Hs)
    out = jax.nn.relu(M.reshape(B, -1) @ params["W_fc1"].T + params["b_fc1"])
    return out @ params["W_lin"].T + params["b_lin"]                    # (B, C)


if __name__ == "__main__":
    B, T = 2, 16
    bert_size, hidden_size = 32, 32
    attn_hops, mlp_d, num_categories = 2, 64, 5

    key = jax.random.PRNGKey(0)
    k_enc, k_par = jax.random.split(key, 2)

    # Stand-in for the (untranslated) BERT encoder output.
    encoder_layer = jax.random.normal(k_enc, (B, T, bert_size), jnp.float32)

    # 0/1 segment ids: sentence 0 has 12 leading segment-0 tokens, sentence 1 has 9.
    bert_segment = jnp.zeros((B, T), jnp.int32)
    bert_segment = bert_segment.at[0, 12:].set(1).at[1, 9:].set(1)

    params = init_bert_attn_params(k_par, bert_size, hidden_size,
                                   attn_hops, mlp_d, num_categories)

    logits = bert_attn_forward(encoder_layer, bert_segment, params)
    logits = jax.block_until_ready(logits)
    assert logits.shape == (B, num_categories)

    ref = _ref_forward(encoder_layer, bert_segment, params)
    assert jnp.allclose(logits, ref, atol=1e-3, rtol=1e-3), (
        f"max abs err {float(jnp.max(jnp.abs(logits - ref)))}")

    print("KERNEL_OK")
</pallas_src>

<mosaic_0001>
module attributes {stable_mosaic.version = 11 : i64} {
  func.func @_bert_attn_kernel(%arg0: i32, %arg1: memref<1x12x32xf32, #tpu.memory_space<vmem>>, %arg2: memref<1x12x1xf32, #tpu.memory_space<vmem>>, %arg3: memref<32x32xf32, #tpu.memory_space<vmem>>, %arg4: memref<1x32xf32, #tpu.memory_space<vmem>>, %arg5: memref<32x64xf32, #tpu.memory_space<vmem>>, %arg6: memref<2x64xf32, #tpu.memory_space<vmem>>, %arg7: memref<2x32x64xf32, #tpu.memory_space<vmem>>, %arg8: memref<1x64xf32, #tpu.memory_space<vmem>>, %arg9: memref<64x5xf32, #tpu.memory_space<vmem>>, %arg10: memref<1x5xf32, #tpu.memory_space<vmem>>, %arg11: memref<1x1x5xf32, #tpu.memory_space<vmem>>) attributes {dimension_semantics = [#tpu.dimension_semantics<parallel>], iteration_bounds = array<i64: 2>, scalar_prefetch = 0 : i64, scratch_operands = 0 : i64, tpu.core_type = #tpu.core_type<tc>, window_params = [{transform_indices = @transform_0, window_bounds = array<i64: 1, 12, 32>}, {transform_indices = @transform_1, window_bounds = array<i64: 1, 12, 1>}, {pipeline_mode = #tpu.pipeline_mode<synchronous>, transform_indices = @transform_2, window_bounds = array<i64: 32, 32>}, {pipeline_mode = #tpu.pipeline_mode<synchronous>, transform_indices = @transform_3, window_bounds = array<i64: 1, 32>}, {pipeline_mode = #tpu.pipeline_mode<synchronous>, transform_indices = @transform_4, window_bounds = array<i64: 32, 64>}, {pipeline_mode = #tpu.pipeline_mode<synchronous>, transform_indices = @transform_5, window_bounds = array<i64: 2, 64>}, {pipeline_mode = #tpu.pipeline_mode<synchronous>, transform_indices = @transform_6, window_bounds = array<i64: 2, 32, 64>}, {pipeline_mode = #tpu.pipeline_mode<synchronous>, transform_indices = @transform_7, window_bounds = array<i64: 1, 64>}, {pipeline_mode = #tpu.pipeline_mode<synchronous>, transform_indices = @transform_8, window_bounds = array<i64: 64, 5>}, {pipeline_mode = #tpu.pipeline_mode<synchronous>, transform_indices = @transform_9, window_bounds = array<i64: 1, 5>}, {transform_indices = @transform_10, window_bounds = array<i64: 1, 1, 5>}]} {
    %c0 = arith.constant 0 : index
    %c0_0 = arith.constant 0 : index
    %c0_1 = arith.constant 0 : index
    %0 = vector.load %arg1[%c0, %c0_0, %c0_1] : memref<1x12x32xf32, #tpu.memory_space<vmem>>, vector<1x12x32xf32>
    %1 = vector.shape_cast %0 : vector<1x12x32xf32> to vector<12x32xf32>
    %c0_2 = arith.constant 0 : index
    %c0_3 = arith.constant 0 : index
    %c0_4 = arith.constant 0 : index
    %2 = vector.load %arg2[%c0_2, %c0_3, %c0_4] : memref<1x12x1xf32, #tpu.memory_space<vmem>>, vector<1x12x1xf32>
    %3 = vector.shape_cast %2 : vector<1x12x1xf32> to vector<12x1xf32>
    %4 = vector.broadcast %3 : vector<12x1xf32> to vector<12x32xf32>
    %5 = arith.mulf %1, %4 : vector<12x32xf32>
    %c0_5 = arith.constant 0 : index
    %c0_6 = arith.constant 0 : index
    %6 = vector.load %arg3[%c0_5, %c0_6] : memref<32x32xf32, #tpu.memory_space<vmem>>, vector<32x32xf32>
    %cst = arith.constant dense<0.000000e+00> : vector<12x32xf32>
    %7 = tpu.matmul %5, %6, %cst {dimension_numbers = #tpu.dot_dimension_numbers<[1], [0], [0], [1], [0, 0, 1, 1], [], []>} : vector<12x32xf32>, vector<32x32xf32>, vector<12x32xf32> -> vector<12x32xf32>
    %c0_7 = arith.constant 0 : index
    %c0_8 = arith.constant 0 : index
    %8 = vector.load %arg4[%c0_7, %c0_8] : memref<1x32xf32, #tpu.memory_space<vmem>>, vector<1x32xf32>
    %9 = vector.broadcast %8 : vector<1x32xf32> to vector<12x32xf32>
    %10 = arith.addf %7, %9 : vector<12x32xf32>
    %c0_9 = arith.constant 0 : index
    %c0_10 = arith.constant 0 : index
    %11 = vector.load %arg5[%c0_9, %c0_10] : memref<32x64xf32, #tpu.memory_space<vmem>>, vector<32x64xf32>
    %cst_11 = arith.constant dense<0.000000e+00> : vector<12x64xf32>
    %12 = tpu.matmul %10, %11, %cst_11 {dimension_numbers = #tpu.dot_dimension_numbers<[1], [0], [0], [1], [0, 0, 1, 1], [], []>} : vector<12x32xf32>, vector<32x64xf32>, vector<12x64xf32> -> vector<12x64xf32>
    %13 = math.tanh %12 : vector<12x64xf32>
    %c0_12 = arith.constant 0 : index
    %c0_13 = arith.constant 0 : index
    %14 = vector.load %arg6[%c0_12, %c0_13] : memref<2x64xf32, #tpu.memory_space<vmem>>, vector<2x64xf32>
    "tpu.trace_start"() <{level = 10 : i32, message = "rd,nd->rn"}> : () -> ()
    %cst_14 = arith.constant dense<0.000000e+00> : vector<2x12xf32>
    %15 = tpu.matmul %14, %13, %cst_14 {dimension_numbers = #tpu.dot_dimension_numbers<[1], [1], [0], [0], [0, 0, 1, 0], [], []>} : vector<2x64xf32>, vector<12x64xf32>, vector<2x12xf32> -> vector<2x12xf32>
    "tpu.trace_stop"() : () -> ()
    %cst_15 = arith.constant dense<0xFF800000> : vector<2xf32>
    %16 = vector.multi_reduction <maximumf>, %15, %cst_15 [1] : vector<2x12xf32> to vector<2xf32>
    %17 = vector.shape_cast %16 : vector<2xf32> to vector<2x1xf32>
    %18 = vector.broadcast %17 : vector<2x1xf32> to vector<2x12xf32>
    %19 = arith.subf %15, %18 : vector<2x12xf32>
    %20 = math.exp %19 : vector<2x12xf32>
    %cst_16 = arith.constant dense<0.000000e+00> : vector<2xf32>
    %21 = vector.multi_reduction <add>, %20, %cst_16 [1] : vector<2x12xf32> to vector<2xf32>
    %22 = vector.shape_cast %21 : vector<2xf32> to vector<2x1xf32>
    %23 = vector.broadcast %22 : vector<2x1xf32> to vector<2x12xf32>
    %24 = arith.divf %20, %23 : vector<2x12xf32>
    %cst_17 = arith.constant dense<0.000000e+00> : vector<2x32xf32>
    %25 = tpu.matmul %24, %10, %cst_17 {dimension_numbers = #tpu.dot_dimension_numbers<[1], [0], [0], [1], [0, 0, 1, 1], [], []>} : vector<2x12xf32>, vector<12x32xf32>, vector<2x32xf32> -> vector<2x32xf32>
    %c0_18 = arith.constant 0 : index
    %c0_19 = arith.constant 0 : index
    %26 = vector.load %arg8[%c0_18, %c0_19] : memref<1x64xf32, #tpu.memory_space<vmem>>, vector<1x64xf32>
    %27 = vector.extract_strided_slice %25 {offsets = [0, 0], sizes = [1, 32], strides = [1, 1]} : vector<2x32xf32> to vector<1x32xf32>
    %c0_20 = arith.constant 0 : index
    %c0_21 = arith.constant 0 : index
    %c0_22 = arith.constant 0 : index
    %28 = vector.load %arg7[%c0_20, %c0_21, %c0_22] : memref<2x32x64xf32, #tpu.memory_space<vmem>>, vector<1x32x64xf32>
    %29 = vector.shape_cast %28 : vector<1x32x64xf32> to vector<32x64xf32>
    %cst_23 = arith.constant dense<0.000000e+00> : vector<1x64xf32>
    %30 = tpu.matmul %27, %29, %cst_23 {dimension_numbers = #tpu.dot_dimension_numbers<[1], [0], [0], [1], [0, 0, 1, 1], [], []>} : vector<1x32xf32>, vector<32x64xf32>, vector<1x64xf32> -> vector<1x64xf32>
    %31 = arith.addf %26, %30 : vector<1x64xf32>
    %32 = vector.extract_strided_slice %25 {offsets = [1, 0], sizes = [1, 32], strides = [1, 1]} : vector<2x32xf32> to vector<1x32xf32>
    %c1 = arith.constant 1 : index
    %c0_24 = arith.constant 0 : index
    %c0_25 = arith.constant 0 : index
    %33 = vector.load %arg7[%c1, %c0_24, %c0_25] : memref<2x32x64xf32, #tpu.memory_space<vmem>>, vector<1x32x64xf32>
    %34 = vector.shape_cast %33 : vector<1x32x64xf32> to vector<32x64xf32>
    %cst_26 = arith.constant dense<0.000000e+00> : vector<1x64xf32>
    %35 = tpu.matmul %32, %34, %cst_26 {dimension_numbers = #tpu.dot_dimension_numbers<[1], [0], [0], [1], [0, 0, 1, 1], [], []>} : vector<1x32xf32>, vector<32x64xf32>, vector<1x64xf32> -> vector<1x64xf32>
    %36 = arith.addf %31, %35 : vector<1x64xf32>
    %cst_27 = arith.constant 0.000000e+00 : f32
    %37 = vector.broadcast %cst_27 : f32 to vector<1x64xf32>
    %38 = arith.maximumf %36, %37 : vector<1x64xf32>
    %c0_28 = arith.constant 0 : index
    %c0_29 = arith.constant 0 : index
    %39 = vector.load %arg9[%c0_28, %c0_29] : memref<64x5xf32, #tpu.memory_space<vmem>>, vector<64x5xf32>
    %cst_30 = arith.constant dense<0.000000e+00> : vector<1x5xf32>
    %40 = tpu.matmul %38, %39, %cst_30 {dimension_numbers = #tpu.dot_dimension_numbers<[1], [0], [0], [1], [0, 0, 1, 1], [], []>} : vector<1x64xf32>, vector<64x5xf32>, vector<1x5xf32> -> vector<1x5xf32>
    %c0_31 = arith.constant 0 : index
    %c0_32 = arith.constant 0 : index
    %41 = vector.load %arg10[%c0_31, %c0_32] : memref<1x5xf32, #tpu.memory_space<vmem>>, vector<1x5xf32>
    %42 = arith.addf %40, %41 : vector<1x5xf32>
    %c0_33 = arith.constant 0 : index
    %c0_34 = arith.constant 0 : index
    %c0_35 = arith.constant 0 : index
    %43 = vector.load %arg11[%c0_33, %c0_34, %c0_35] : memref<1x1x5xf32, #tpu.memory_space<vmem>>, vector<1x1x5xf32>
    %44 = vector.shape_cast %43 : vector<1x1x5xf32> to vector<1x5xf32>
    %45 = vector.shape_cast %42 : vector<1x5xf32> to vector<1x1x5xf32>
    tpu.vector_store %arg11[%c0_33, %c0_34, %c0_35], %45 {strides = array<i32>} : memref<1x1x5xf32, #tpu.memory_space<vmem>>, vector<1x1x5xf32>,
    return
  }
  func.func @transform_0(%arg0: i32) -> (i32, i32, i32) {
    %c0_i32 = arith.constant 0 : i32
    %c0_i32_0 = arith.constant 0 : i32
    %c0_i32_1 = arith.constant 0 : i32
    return %arg0, %c0_i32, %c0_i32_0 : i32, i32, i32
  }
  func.func @transform_1(%arg0: i32) -> (i32, i32, i32) {
    %c0_i32 = arith.constant 0 : i32
    %c0_i32_0 = arith.constant 0 : i32
    %c0_i32_1 = arith.constant 0 : i32
    return %arg0, %c0_i32, %c0_i32_0 : i32, i32, i32
  }
  func.func @transform_2(%arg0: i32) -> (i32, i32) {
    %c0_i32 = arith.constant 0 : i32
    %c0_i32_0 = arith.constant 0 : i32
    %c0_i32_1 = arith.constant 0 : i32
    return %c0_i32, %c0_i32_0 : i32, i32
  }
  func.func @transform_3(%arg0: i32) -> (i32, i32) {
    %c0_i32 = arith.constant 0 : i32
    %c0_i32_0 = arith.constant 0 : i32
    %c0_i32_1 = arith.constant 0 : i32
    return %c0_i32, %c0_i32_0 : i32, i32
  }
  func.func @transform_4(%arg0: i32) -> (i32, i32) {
    %c0_i32 = arith.constant 0 : i32
    %c0_i32_0 = arith.constant 0 : i32
    %c0_i32_1 = arith.constant 0 : i32
    return %c0_i32, %c0_i32_0 : i32, i32
  }
  func.func @transform_5(%arg0: i32) -> (i32, i32) {
    %c0_i32 = arith.constant 0 : i32
    %c0_i32_0 = arith.constant 0 : i32
    %c0_i32_1 = arith.constant 0 : i32
    return %c0_i32, %c0_i32_0 : i32, i32
  }
  func.func @transform_6(%arg0: i32) -> (i32, i32, i32) {
    %c0_i32 = arith.constant 0 : i32
    %c0_i32_0 = arith.constant 0 : i32
    %c0_i32_1 = arith.constant 0 : i32
    %c0_i32_2 = arith.constant 0 : i32
    return %c0_i32, %c0_i32_0, %c0_i32_1 : i32, i32, i32
  }
  func.func @transform_7(%arg0: i32) -> (i32, i32) {
    %c0_i32 = arith.constant 0 : i32
    %c0_i32_0 = arith.constant 0 : i32
    %c0_i32_1 = arith.constant 0 : i32
    return %c0_i32, %c0_i32_0 : i32, i32
  }
  func.func @transform_8(%arg0: i32) -> (i32, i32) {
    %c0_i32 = arith.constant 0 : i32
    %c0_i32_0 = arith.constant 0 : i32
    %c0_i32_1 = arith.constant 0 : i32
    return %c0_i32, %c0_i32_0 : i32, i32
  }
  func.func @transform_9(%arg0: i32) -> (i32, i32) {
    %c0_i32 = arith.constant 0 : i32
    %c0_i32_0 = arith.constant 0 : i32
    %c0_i32_1 = arith.constant 0 : i32
    return %c0_i32, %c0_i32_0 : i32, i32
  }
  func.func @transform_10(%arg0: i32) -> (i32, i32, i32) {
    %c0_i32 = arith.constant 0 : i32
    %c0_i32_0 = arith.constant 0 : i32
    %c0_i32_1 = arith.constant 0 : i32
    return %arg0, %c0_i32, %c0_i32_0 : i32, i32, i32
  }
}

</mosaic_0001>

<llo_original>
// kernel: tpu_custom_call.1
$region0: #{tpu_custom_call.1}
  #allocation0 [shape = 'u32[]', space=smem, size = 0x4, offset = 0x4, fixed_abs, tag = 'smem constant byte address 0x4 - core index']
  #allocation1 [shape = 'u32[72,128]{1,0:T(1,128)}', space=vmem, size = 0x9000, scoped, tag = 'internal scratch']
  %s0 = inlined_call_operand.vmem [shape: f32[2,12,32], index: 0, kind: input, shape index: {}]
  %s1 = inlined_call_operand.vmem [shape: f32[2,12,1], index: 1, kind: input, shape index: {}]
  %s2 = inlined_call_operand.vmem [shape: f32[32,32], index: 2, kind: input, shape index: {}]
  %s3 = inlined_call_operand.vmem [shape: f32[1,32], index: 3, kind: input, shape index: {}]
  %s4 = inlined_call_operand.vmem [shape: f32[32,64], index: 4, kind: input, shape index: {}]
  %s5 = inlined_call_operand.vmem [shape: f32[2,64], index: 5, kind: input, shape index: {}]
  %s6 = inlined_call_operand.vmem [shape: f32[2,32,64], index: 6, kind: input, shape index: {}]
  %s7 = inlined_call_operand.vmem [shape: f32[1,64], index: 7, kind: input, shape index: {}]
  %s8 = inlined_call_operand.vmem [shape: f32[64,5], index: 8, kind: input, shape index: {}]
  %s9 = inlined_call_operand.vmem [shape: f32[1,5], index: 9, kind: input, shape index: {}]
  %s10 = inlined_call_operand.hbm [shape: f32[2,1,5], index: 10, kind: output, shape index: {}]
  %s11 = sld [smem:[#allocation0]]
  $region73: #{tpu_custom_call.1} parent=0
    _
  %s13 = ssub.s32 1, %s11
  %s14 = scalar_select 0, %s13, %s11
  $region1: #{tpu_custom_call.1} parent=0
    #allocation2 [shape = 'u8[1024]{0}', space=vmem, size = 0x400, scoped, tag = 'output window, operand 0']
    #allocation3 [shape = 's32[2]{0}', space=sflag, size = 0x8, scoped, tag = 'scoped memory for tpu_custom_call.1']
    %15 = vsyncpa [#allocation3], 0
    %s16 = scalar_lea.sflag [#allocation3], 1
    %17 = vsyncpa %s16, 0
    loop: start=0, step=1, limit=4
    $region2: #{tpu_custom_call.1} parent=1 // loop_pre_header
      _
    $region3: #{tpu_custom_call.1} parent=1 // loop_header
      %s19 = sphi 0, %s23
      %p20 = scmp.ge.s32.totalorder %s19, 4
      %s29 = sphi 0, %s31
      %s32 = sphi 0, %s29
      %s33 = sphi 0, %s32
      %s49 = sphi 0, %s33
      %s55 = sphi 0, %s57
      %s58 = sphi 0, %s55
      %s59 = sphi 0, %s58
      %s75 = sphi 0, %s59
      %s79 = sphi 0, %s79
      %s81 = sphi 0, %s79
      %s82 = sphi 0, %s81
      %s96 = sphi 0, %s82
      %s100 = sphi 0, %s100
      %s102 = sphi 0, %s100
      %s103 = sphi 0, %s102
      %s117 = sphi 0, %s103
      %s121 = sphi 0, %s121
      %s123 = sphi 0, %s121
      %s124 = sphi 0, %s123
      %s138 = sphi 0, %s124
      %s142 = sphi 0, %s142
      %s144 = sphi 0, %s142
      %s145 = sphi 0, %s144
      %s159 = sphi 0, %s145
      %s163 = sphi 0, %s163
      %s165 = sphi 0, %s163
      %s166 = sphi 0, %s165
      %s180 = sphi 0, %s166
      %s184 = sphi 0, %s184
      %s186 = sphi 0, %s184
      %s187 = sphi 0, %s186
      %s201 = sphi 0, %s187
      %s205 = sphi 0, %s205
      %s207 = sphi 0, %s205
      %s208 = sphi 0, %s207
      %s222 = sphi 0, %s208
      %s226 = sphi 0, %s226
      %s228 = sphi 0, %s226
      %s229 = sphi 0, %s228
      %s243 = sphi 0, %s229
      %s249 = sphi 0, %s251
      %s252 = sphi 0, %s249
      %s253 = sphi 0, %s252
      %s269 = sphi 0, %s253
    $region4: #{tpu_custom_call.1} parent=1 // loop_header_branch
      %22 = sbr.rel (%p20) target = $region8
    $region5: #{tpu_custom_call.1} parent=1 // loop_body
      %s24 = ssub.s32 %s19, 1
      %s25 = ssub.s32 %s19, 2
      %s26 = sadd.s32 %s19, 1
      %s27 = ssub.s32 %s19, %s26
      %p28 = scmp.eq.s32.totalorder %s27, 0
      %s30 = sadd.s32 %s29, 1
      %s31 = scalar_select %p28, %s29, %s30
      %p34 = pneg %p28
      %p35 = scmp.eq.s32.totalorder %s19, 1
      %p36 = por %p34, %p35
      %p37 = scmp.ne.s32.totalorder %s29, %s32
      %p38 = scmp.eq.s32.totalorder %s19, 0
      %p39 = por %p37, %p38
      %p40 = scmp.ne.s32.totalorder %s29, %s32
      %p41 = scmp.eq.s32.totalorder %s24, 1
      %p42 = por %p40, %p41
      %p43 = scmp.ne.s32.totalorder %s32, %s33
      %p44 = scmp.eq.s32.totalorder %s24, 0
      %p45 = por %p43, %p44
      %p46 = scmp.ne.s32.totalorder %s32, %s33
      %p47 = scmp.eq.s32.totalorder %s25, 1
      %p48 = por %p46, %p47
      %p50 = scmp.ne.s32.totalorder %s33, %s49
      %p51 = scmp.eq.s32.totalorder %s25, 0
      %p52 = por %p50, %p51
      %s53 = ssub.s32 %s19, %s26
      %p54 = scmp.eq.s32.totalorder %s53, 0
      %s56 = sadd.s32 %s55, 1
      %s57 = scalar_select %p54, %s55, %s56
      %p60 = pneg %p54
      %p61 = scmp.eq.s32.totalorder %s19, 1
      %p62 = por %p60, %p61
      %p63 = scmp.ne.s32.totalorder %s55, %s58
      %p64 = scmp.eq.s32.totalorder %s19, 0
      %p65 = por %p63, %p64
      %p66 = scmp.ne.s32.totalorder %s55, %s58
      %p67 = scmp.eq.s32.totalorder %s24, 1
      %p68 = por %p66, %p67
      %p69 = scmp.ne.s32.totalorder %s58, %s59
      %p70 = scmp.eq.s32.totalorder %s24, 0
      %p71 = por %p69, %p70
      %p72 = scmp.ne.s32.totalorder %s58, %s59
      %p73 = scmp.eq.s32.totalorder %s25, 1
      %p74 = por %p72, %p73
      %p76 = scmp.ne.s32.totalorder %s59, %s75
      %p77 = scmp.eq.s32.totalorder %s25, 0
      %p78 = por %p76, %p77
      %s80 = sadd.s32 %s79, 1
      %p83 = scmp.eq.s32.totalorder %s19, 1
      %p84 = scmp.ne.s32.totalorder %s79, %s81
      %p85 = scmp.eq.s32.totalorder %s19, 0
      %p86 = por %p84, %p85
      %p87 = scmp.ne.s32.totalorder %s79, %s81
      %p88 = scmp.eq.s32.totalorder %s24, 1
      %p89 = por %p87, %p88
      %p90 = scmp.ne.s32.totalorder %s81, %s82
      %p91 = scmp.eq.s32.totalorder %s24, 0
      %p92 = por %p90, %p91
      %p93 = scmp.ne.s32.totalorder %s81, %s82
      %p94 = scmp.eq.s32.totalorder %s25, 1
      %p95 = por %p93, %p94
      %p97 = scmp.ne.s32.totalorder %s82, %s96
      %p98 = scmp.eq.s32.totalorder %s25, 0
      %p99 = por %p97, %p98
      %s101 = sadd.s32 %s100, 1
      %p104 = scmp.eq.s32.totalorder %s19, 1
      %p105 = scmp.ne.s32.totalorder %s100, %s102
      %p106 = scmp.eq.s32.totalorder %s19, 0
      %p107 = por %p105, %p106
      %p108 = scmp.ne.s32.totalorder %s100, %s102
      %p109 = scmp.eq.s32.totalorder %s24, 1
      %p110 = por %p108, %p109
      %p111 = scmp.ne.s32.totalorder %s102, %s103
      %p112 = scmp.eq.s32.totalorder %s24, 0
      %p113 = por %p111, %p112
      %p114 = scmp.ne.s32.totalorder %s102, %s103
      %p115 = scmp.eq.s32.totalorder %s25, 1
      %p116 = por %p114, %p115
      %p118 = scmp.ne.s32.totalorder %s103, %s117
      %p119 = scmp.eq.s32.totalorder %s25, 0
      %p120 = por %p118, %p119
      %s122 = sadd.s32 %s121, 1
      %p125 = scmp.eq.s32.totalorder %s19, 1
      %p126 = scmp.ne.s32.totalorder %s121, %s123
      %p127 = scmp.eq.s32.totalorder %s19, 0
      %p128 = por %p126, %p127
      %p129 = scmp.ne.s32.totalorder %s121, %s123
      %p130 = scmp.eq.s32.totalorder %s24, 1
      %p131 = por %p129, %p130
      %p132 = scmp.ne.s32.totalorder %s123, %s124
      %p133 = scmp.eq.s32.totalorder %s24, 0
      %p134 = por %p132, %p133
      %p135 = scmp.ne.s32.totalorder %s123, %s124
      %p136 = scmp.eq.s32.totalorder %s25, 1
      %p137 = por %p135, %p136
      %p139 = scmp.ne.s32.totalorder %s124, %s138
      %p140 = scmp.eq.s32.totalorder %s25, 0
      %p141 = por %p139, %p140
      %s143 = sadd.s32 %s142, 1
      %p146 = scmp.eq.s32.totalorder %s19, 1
      %p147 = scmp.ne.s32.totalorder %s142, %s144
      %p148 = scmp.eq.s32.totalorder %s19, 0
      %p149 = por %p147, %p148
      %p150 = scmp.ne.s32.totalorder %s142, %s144
      %p151 = scmp.eq.s32.totalorder %s24, 1
      %p152 = por %p150, %p151
      %p153 = scmp.ne.s32.totalorder %s144, %s145
      %p154 = scmp.eq.s32.totalorder %s24, 0
      %p155 = por %p153, %p154
      %p156 = scmp.ne.s32.totalorder %s144, %s145
      %p157 = scmp.eq.s32.totalorder %s25, 1
      %p158 = por %p156, %p157
      %p160 = scmp.ne.s32.totalorder %s145, %s159
      %p161 = scmp.eq.s32.totalorder %s25, 0
      %p162 = por %p160, %p161
      %s164 = sadd.s32 %s163, 1
      %p167 = scmp.eq.s32.totalorder %s19, 1
      %p168 = scmp.ne.s32.totalorder %s163, %s165
      %p169 = scmp.eq.s32.totalorder %s19, 0
      %p170 = por %p168, %p169
      %p171 = scmp.ne.s32.totalorder %s163, %s165
      %p172 = scmp.eq.s32.totalorder %s24, 1
      %p173 = por %p171, %p172
      %p174 = scmp.ne.s32.totalorder %s165, %s166
      %p175 = scmp.eq.s32.totalorder %s24, 0
      %p176 = por %p174, %p175
      %p177 = scmp.ne.s32.totalorder %s165, %s166
      %p178 = scmp.eq.s32.totalorder %s25, 1
      %p179 = por %p177, %p178
      %p181 = scmp.ne.s32.totalorder %s166, %s180
      %p182 = scmp.eq.s32.totalorder %s25, 0
      %p183 = por %p181, %p182
      %s185 = sadd.s32 %s184, 1
      %p188 = scmp.eq.s32.totalorder %s19, 1
      %p189 = scmp.ne.s32.totalorder %s184, %s186
      %p190 = scmp.eq.s32.totalorder %s19, 0
      %p191 = por %p189, %p190
      %p192 = scmp.ne.s32.totalorder %s184, %s186
      %p193 = scmp.eq.s32.totalorder %s24, 1
      %p194 = por %p192, %p193
      %p195 = scmp.ne.s32.totalorder %s186, %s187
      %p196 = scmp.eq.s32.totalorder %s24, 0
      %p197 = por %p195, %p196
      %p198 = scmp.ne.s32.totalorder %s186, %s187
      %p199 = scmp.eq.s32.totalorder %s25, 1
      %p200 = por %p198, %p199
      %p202 = scmp.ne.s32.totalorder %s187, %s201
      %p203 = scmp.eq.s32.totalorder %s25, 0
      %p204 = por %p202, %p203
      %s206 = sadd.s32 %s205, 1
      %p209 = scmp.eq.s32.totalorder %s19, 1
      %p210 = scmp.ne.s32.totalorder %s205, %s207
      %p211 = scmp.eq.s32.totalorder %s19, 0
      %p212 = por %p210, %p211
      %p213 = scmp.ne.s32.totalorder %s205, %s207
      %p214 = scmp.eq.s32.totalorder %s24, 1
      %p215 = por %p213, %p214
      %p216 = scmp.ne.s32.totalorder %s207, %s208
      %p217 = scmp.eq.s32.totalorder %s24, 0
      %p218 = por %p216, %p217
      %p219 = scmp.ne.s32.totalorder %s207, %s208
      %p220 = scmp.eq.s32.totalorder %s25, 1
      %p221 = por %p219, %p220
      %p223 = scmp.ne.s32.totalorder %s208, %s222
      %p224 = scmp.eq.s32.totalorder %s25, 0
      %p225 = por %p223, %p224
      %s227 = sadd.s32 %s226, 1
      %p230 = scmp.eq.s32.totalorder %s19, 1
      %p231 = scmp.ne.s32.totalorder %s226, %s228
      %p232 = scmp.eq.s32.totalorder %s19, 0
      %p233 = por %p231, %p232
      %p234 = scmp.ne.s32.totalorder %s226, %s228
      %p235 = scmp.eq.s32.totalorder %s24, 1
      %p236 = por %p234, %p235
      %p237 = scmp.ne.s32.totalorder %s228, %s229
      %p238 = scmp.eq.s32.totalorder %s24, 0
      %p239 = por %p237, %p238
      %p240 = scmp.ne.s32.totalorder %s228, %s229
      %p241 = scmp.eq.s32.totalorder %s25, 1
      %p242 = por %p240, %p241
      %p244 = scmp.ne.s32.totalorder %s229, %s243
      %p245 = scmp.eq.s32.totalorder %s25, 0
      %p246 = por %p244, %p245
      %s247 = ssub.s32 %s19, %s26
      %p248 = scmp.eq.s32.totalorder %s247, 0
      %s250 = sadd.s32 %s249, 1
      %s251 = scalar_select %p248, %s249, %s250
      %p254 = pneg %p248
      %p255 = scmp.eq.s32.totalorder %s19, 1
      %p256 = por %p254, %p255
      %p257 = scmp.ne.s32.totalorder %s249, %s252
      %p258 = scmp.eq.s32.totalorder %s19, 0
      %p259 = por %p257, %p258
      %p260 = scmp.ne.s32.totalorder %s249, %s252
      %p261 = scmp.eq.s32.totalorder %s24, 1
      %p262 = por %p260, %p261
      %p263 = scmp.ne.s32.totalorder %s252, %s253
      %p264 = scmp.eq.s32.totalorder %s24, 0
      %p265 = por %p263, %p264
      %p266 = scmp.ne.s32.totalorder %s252, %s253
      %p267 = scmp.eq.s32.totalorder %s25, 1
      %p268 = por %p266, %p267
      %p270 = scmp.ne.s32.totalorder %s253, %s269
      %p271 = scmp.eq.s32.totalorder %s25, 0
      %p272 = por %p270, %p271
      %p273 = scmp.le.s32.totalorder 1, %s19
      %p274 = scmp.lt.s32.totalorder %s19, 3
      %p275 = pnand %p273, %p274
      %p276 = pneg %p275
      // Predicated region
      $region9: #{tpu_custom_call.1} parent=5 // pred_check
        _
      $region10: #{tpu_custom_call.1} parent=5 // pred_check_branch
        %278 = sbr.rel (%p275) target = $region12
      $region11: #{tpu_custom_call.1} parent=5 // pred_region
        %s279 = ssub.s32 %s19, 1
        // Predicated region
        $region13: #{tpu_custom_call.1} parent=11 // pred_check
          %p280 = pneg %p92
        $region14: #{tpu_custom_call.1} parent=11 // pred_check_branch
          %282 = sbr.rel (%p280) target = $region16
        $region15: #{tpu_custom_call.1} parent=11 // pred_region
          _
        $region16: #{tpu_custom_call.1} parent=11 // pred_fallthru
          _
        // Predicated region
        $region17: #{tpu_custom_call.1} parent=11 // pred_check
          %p283 = pneg %p113
        $region18: #{tpu_custom_call.1} parent=11 // pred_check_branch
          %285 = sbr.rel (%p283) target = $region20
        $region19: #{tpu_custom_call.1} parent=11 // pred_region
          _
        $region20: #{tpu_custom_call.1} parent=11 // pred_fallthru
          _
        // Predicated region
        $region21: #{tpu_custom_call.1} parent=11 // pred_check
          %p286 = pneg %p134
        $region22: #{tpu_custom_call.1} parent=11 // pred_check_branch
          %288 = sbr.rel (%p286) target = $region24
        $region23: #{tpu_custom_call.1} parent=11 // pred_region
          _
        $region24: #{tpu_custom_call.1} parent=11 // pred_fallthru
          _
        // Predicated region
        $region25: #{tpu_custom_call.1} parent=11 // pred_check
          %p289 = pneg %p155
        $region26: #{tpu_custom_call.1} parent=11 // pred_check_branch
          %291 = sbr.rel (%p289) target = $region28
        $region27: #{tpu_custom_call.1} parent=11 // pred_region
          _
        $region28: #{tpu_custom_call.1} parent=11 // pred_fallthru
          _
        // Predicated region
        $region29: #{tpu_custom_call.1} parent=11 // pred_check
          %p292 = pneg %p176
        $region30: #{tpu_custom_call.1} parent=11 // pred_check_branch
          %294 = sbr.rel (%p292) target = $region32
        $region31: #{tpu_custom_call.1} parent=11 // pred_region
          _
        $region32: #{tpu_custom_call.1} parent=11 // pred_fallthru
          _
        // Predicated region
        $region33: #{tpu_custom_call.1} parent=11 // pred_check
          %p295 = pneg %p197
        $region34: #{tpu_custom_call.1} parent=11 // pred_check_branch
          %297 = sbr.rel (%p295) target = $region36
        $region35: #{tpu_custom_call.1} parent=11 // pred_region
          _
        $region36: #{tpu_custom_call.1} parent=11 // pred_fallthru
          _
        // Predicated region
        $region37: #{tpu_custom_call.1} parent=11 // pred_check
          %p298 = pneg %p218
        $region38: #{tpu_custom_call.1} parent=11 // pred_check_branch
          %300 = sbr.rel (%p298) target = $region40
        $region39: #{tpu_custom_call.1} parent=11 // pred_region
          _
        $region40: #{tpu_custom_call.1} parent=11 // pred_fallthru
          _
        // Predicated region
        $region41: #{tpu_custom_call.1} parent=11 // pred_check
          %p301 = pneg %p239
        $region42: #{tpu_custom_call.1} parent=11 // pred_check_branch
          %303 = sbr.rel (%p301) target = $region44
        $region43: #{tpu_custom_call.1} parent=11 // pred_region
          _
        $region44: #{tpu_custom_call.1} parent=11 // pred_fallthru
          _
      $region12: #{tpu_custom_call.1} parent=5 // pred_fallthru
        _
      %p304 = scmp.lt.s32.totalorder %s19, 2
      // Predicated region
      $region45: #{tpu_custom_call.1} parent=5 // pred_check
        %p305 = pneg %p304
      $region46: #{tpu_custom_call.1} parent=5 // pred_check_branch
        %307 = sbr.rel (%p305) target = $region48
      $region47: #{tpu_custom_call.1} parent=5 // pred_region
        // Predicated region
        $region49: #{tpu_custom_call.1} parent=47 // pred_check
          %p308 = pneg %p39
        $region50: #{tpu_custom_call.1} parent=47 // pred_check_branch
          %310 = sbr.rel (%p308) target = $region52
        $region51: #{tpu_custom_call.1} parent=47 // pred_region
          %p311 = scmp.lt.s32.totalorder %s19, 1
          %s312 = scalar_select %p311, %s19, 1
          %s313 = smul.addr %s312, 2
          %s314 = smul.addr %s313, 8
          %s315 = scalar_lea.vmem %s0, %s314
        $region52: #{tpu_custom_call.1} parent=47 // pred_fallthru
          _
        // Predicated region
        $region53: #{tpu_custom_call.1} parent=47 // pred_check
          %p316 = pneg %p65
        $region54: #{tpu_custom_call.1} parent=47 // pred_check_branch
          %318 = sbr.rel (%p316) target = $region56
        $region55: #{tpu_custom_call.1} parent=47 // pred_region
          %p319 = scmp.lt.s32.totalorder %s19, 1
          %s320 = scalar_select %p319, %s19, 1
          %s321 = smul.addr %s320, 2
          %s322 = smul.addr %s321, 8
          %s323 = scalar_lea.vmem %s1, %s322
        $region56: #{tpu_custom_call.1} parent=47 // pred_fallthru
          _
      $region48: #{tpu_custom_call.1} parent=5 // pred_fallthru
        _
      %p324 = scmp.le.s32.totalorder 1, %s19
      %p325 = scmp.lt.s32.totalorder %s19, 3
      %p326 = pnand %p324, %p325
      %p327 = pneg %p326
      // Predicated region
      $region57: #{tpu_custom_call.1} parent=5 // pred_check
        _
      $region58: #{tpu_custom_call.1} parent=5 // pred_check_branch
        %329 = sbr.rel (%p326) target = $region60
      $region59: #{tpu_custom_call.1} parent=5 // pred_region
        %s330 = ssub.s32 %s19, 1
        %p331 = scmp.lt.s32.totalorder %s24, 1
        %s332 = scalar_select %p331, %s24, 1
        %s333 = smul.addr %s332, 2
        %s334 = smul.addr %s333, 8
        %s335 = scalar_lea.vmem %s0, %s334
        %p336 = pneg %p45
        %p337 = pneg %p42
        %p338 = scmp.lt.s32.totalorder %s24, 1
        %s339 = scalar_select %p338, %s24, 1
        %s340 = smul.addr %s339, 2
        %s341 = smul.addr %s340, 8
        %s342 = scalar_lea.vmem %s1, %s341
        %p343 = pneg %p71
        %p344 = pneg %p68
        %p345 = pneg %p92
        %p346 = pneg %p89
        %p347 = pneg %p113
        %p348 = pneg %p110
        %p349 = pneg %p134
        %p350 = pneg %p131
        %p351 = pneg %p155
        %p352 = pneg %p152
        %p353 = pneg %p176
        %p354 = pneg %p173
        %p355 = pneg %p197
        %p356 = pneg %p194
        %p357 = pneg %p218
        %p358 = pneg %p215
        %p359 = pneg %p239
        %p360 = pneg %p236
        %p361 = pneg %p265
        %p362 = pneg %p262
        %s363 = sand.u32 %s252, 1
        %s364 = scalar_lea.sflag [#allocation3], %s363
        %s365 = sand.u32 %s252, 1
        %s366 = scalar_lea.vmem [#allocation2], %s365
        %p367 = scmp.lt.s32.totalorder %s24, 1
        %s368 = scalar_select %p367, %s24, 1
        %s369 = smul.addr %s368, 2
        %s370 = smul.addr %s369, 8
        %s371 = scalar_lea.vmem %s0, %s370
        %p372 = scmp.lt.s32.totalorder %s24, 1
        %s373 = scalar_select %p372, %s24, 1
        %s374 = smul.addr %s373, 2
        %s375 = smul.addr %s374, 8
        %s376 = scalar_lea.vmem %s1, %s375
        %v377 = vld [vmem:[%s371] sm:$0xff]
        %v378 = vld [vmem:[%s371 + $0x8] sm:$0xf]
        %v379 = vld [vmem:[%s376] sm:$0xff]
        %v380 = vld [vmem:[%s376 + $0x8] sm:$0xf]
        %382 = vset.pattern.permute.xlu0 0
        %383 = vperm.xlu0 %382, %v379
        %v384 = vpop.permute.xlu0 %383
        %387 = vset.pattern.permute.xlu0 0
        %388 = vperm.xlu0 %387, %v380
        %v389 = vpop.permute.xlu0 %388
        %v391 = vmul.f32 %v377, %v384
        %v392 = vmul.f32 %v378, %v389
        %v393 = vld [vmem:[%s2] sm:$0xff]
        %v394 = vld [vmem:[%s2 + $0x8] sm:$0xff]
        %v395 = vld [vmem:[%s2 + $0x10] sm:$0xff]
        %v396 = vld [vmem:[%s2 + $0x18] sm:$0xff]
        %v397 = vld [vmem:[%s3] sm:$0x1]
        %v399 = vperm.slane %v397, 0
        %vm401 = vcmask 261120
        %v403 = vsel %vm401, %v391, 0
        %v406 = vsel %vm401, %v392, 0
        %408 = vmatpush.msra.mxu0 0.0
        %409 = vmatpush.msra.mxu0 0.0
        %410 = vmatpush.msra.mxu0 0.0
        %411 = vmatpush.msra.mxu0 0.0
        %412 = vmatpush.msra.mxu0 0.0
        %413 = vmatpush.msra.mxu0 0.0
        %414 = vmatpush.msra.mxu0 0.0
        %415 = vmatpush.msra.mxu0 0.0
        %416 = vmatpush.msra.mxu0 0.0
        %417 = vmatpush.msra.mxu0 0.0
        %418 = vmatpush.msra.mxu0 0.0
        %419 = vmatpush.msra.mxu0 0.0
        %420 = vmatpush.msra.mxu0 %v396
        %421 = vmatpush.msra.mxu0 %v395
        %422 = vmatpush.msra.mxu0 %v394
        %423 = vmatpush.msra.mxu0 %v393
        %424 = vmatmul.f32.gmra.mxu0 %v403
        %v425 = vpop.f32.mrf.mxu0
        %v426 = vadd.f32 %v399, %v425
        %427 = vmatmul.f32.gmra.mxu0 %v406
        %v428 = vpop.f32.mrf.mxu0
        %v429 = vadd.f32 %v399, %v428
        %430 = vdwg.mxu0
        %v431 = vld [vmem:[%s4] sm:$0xff]
        %v432 = vld [vmem:[%s4 + $0x8] sm:$0xff]
        %v433 = vld [vmem:[%s4 + $0x10] sm:$0xff]
        %v434 = vld [vmem:[%s4 + $0x18] sm:$0xff]
        %v436 = vsel %vm401, %v426, 0
        %v439 = vsel %vm401, %v429, 0
        %441 = vmatpush.msra.mxu0 0.0
        %442 = vmatpush.msra.mxu0 0.0
        %443 = vmatpush.msra.mxu0 0.0
        %444 = vmatpush.msra.mxu0 0.0
        %445 = vmatpush.msra.mxu0 0.0
        %446 = vmatpush.msra.mxu0 0.0
        %447 = vmatpush.msra.mxu0 0.0
        %448 = vmatpush.msra.mxu0 0.0
        %449 = vmatpush.msra.mxu0 0.0
        %450 = vmatpush.msra.mxu0 0.0
        %451 = vmatpush.msra.mxu0 0.0
        %452 = vmatpush.msra.mxu0 0.0
        %453 = vmatpush.msra.mxu0 %v434
        %454 = vmatpush.msra.mxu0 %v433
        %455 = vmatpush.msra.mxu0 %v432
        %456 = vmatpush.msra.mxu0 %v431
        %457 = vmatmul.f32.gmra.mxu0 %v436
        %v458 = vpop.f32.mrf.mxu0
        %v459 = vadd.f32 0.0, %v458
        %460 = vmatmul.f32.gmra.mxu0 %v439
        %v461 = vpop.f32.mrf.mxu0
        %v462 = vadd.f32 0.0, %v461
        %463 = vdwg.mxu0
        %v464 = vtanh.pop %v459
        %v465 = vtanh.pop %v462
        %v466 = vld [vmem:[%s5] sm:$0x3]
        %vm467 = vcmask 523264
        %v469 = vsel %vm467, %v466, 0
        %v472 = vsel %vm467, %v464, 0
        %v475 = vsel %vm467, %v465, 0
        %477 = vmatpush.xpose.msra.mxu0 0.0
        %478 = vmatpush.xpose.msra.mxu0 0.0
        %479 = vmatpush.xpose.msra.mxu0 0.0
        %480 = vmatpush.xpose.msra.mxu0 0.0
        %481 = vmatpush.xpose.msra.mxu0 0.0
        %482 = vmatpush.xpose.msra.mxu0 0.0
        %483 = vmatpush.xpose.msra.mxu0 0.0
        %484 = vmatpush.xpose.msra.mxu0 0.0
        %485 = vmatpush.xpose.msra.mxu0 0.0
        %486 = vmatpush.xpose.msra.mxu0 0.0
        %487 = vmatpush.xpose.msra.mxu0 0.0
        %488 = vmatpush.xpose.msra.mxu0 0.0
        %489 = vmatpush.xpose.msra.mxu0 0.0
        %490 = vmatpush.xpose.msra.mxu0 0.0
        %491 = vmatpush.xpose.msra.mxu0 %v475
        %492 = vmatpush.xpose.msra.mxu0 %v472
        %493 = vmatmul.f32.gmra.mxu0 %v469
        %v494 = vpop.f32.mrf.mxu0
        %v495 = vadd.f32 0.0, %v494
        %496 = vdwg.mxu0
        %vm497 = vcmask 91136
        %v498 = vsel %vm497, %v495, -inf
        %499 = vmax.xlane.f32.xlu0 %v498
        %v500 = vpop.xlane.xlu0 %499
        %v501 = vsub.f32 %v495, %v500
        %v502 = vmul.f32 %v501, 1.442695
        %v503 = vpow.pop %v502
        %v504 = vsel %vm497, %v503, 0.0
        %505 = vadd.xlane.f32.xlu0 %v504
        %v506 = vpop.xlane.xlu0 %505
        %v507 = vrcp.pop %v506
        %v508 = vmul.f32 %v506, %v507
        %v509 = vsub.f32 1.0, %v508
        %v510 = vmul.f32 %v507, %v509
        %v511 = vadd.f32 %v507, %v510
        %vm512 = vweird.f32 %v506
        %vm513 = vweird.f32 %v507
        %vm514 = vmor %vm512, %vm513
        %v515 = vsel %vm514, %v507, %v511
        %v516 = vand.u32 2147483647, %v506
        %vm517 = vcmp.eq.f32.partialorder %v516, 8.507059e+37
        %v518 = vand.u32 %v506, 2147483648
        %v519 = vor.u32 1.1754944e-38, %v518
        %v520 = vsel %vm517, %v519, %v515
        %v521 = vmul.f32 %v503, %v520
        %vm522 = vcmask 97280
        %v524 = vsel %vm522, %v521, 0
        %vm526 = vcmask 1043456
        %v527 = vsel %vm526, %v429, 0
        %529 = vmatpush.msra.mxu0 0.0
        %530 = vmatpush.msra.mxu0 0.0
        %531 = vmatpush.msra.mxu0 0.0
        %532 = vmatpush.msra.mxu0 0.0
        %533 = vmatpush.msra.mxu0 0.0
        %534 = vmatpush.msra.mxu0 0.0
        %535 = vmatpush.msra.mxu0 0.0
        %536 = vmatpush.msra.mxu0 0.0
        %537 = vmatpush.msra.mxu0 0.0
        %538 = vmatpush.msra.mxu0 0.0
        %539 = vmatpush.msra.mxu0 0.0
        %540 = vmatpush.msra.mxu0 0.0
        %541 = vmatpush.msra.mxu0 0.0
        %542 = vmatpush.msra.mxu0 0.0
        %543 = vmatpush.msra.mxu0 %v527
        %544 = vmatpush.msra.mxu0 %v426
        %545 = vmatmul.f32.gmra.mxu0 %v524
        %v546 = vpop.f32.mrf.mxu0
        %v547 = vadd.f32 0.0, %v546
        %548 = vdwg.mxu0
        %v549 = vld [vmem:[%s7] sm:$0x1]
        %v550 = vld [vmem:[%s6] sm:$0xff]
        %v551 = vld [vmem:[%s6 + $0x8] sm:$0xff]
        %v552 = vld [vmem:[%s6 + $0x10] sm:$0xff]
        %v553 = vld [vmem:[%s6 + $0x18] sm:$0xff]
        %v555 = vsel %vm401, %v547, 0
        %557 = vmatpush.msra.mxu0 0.0
        %558 = vmatpush.msra.mxu0 0.0
        %559 = vmatpush.msra.mxu0 0.0
        %560 = vmatpush.msra.mxu0 0.0
        %561 = vmatpush.msra.mxu0 0.0
        %562 = vmatpush.msra.mxu0 0.0
        %563 = vmatpush.msra.mxu0 0.0
        %564 = vmatpush.msra.mxu0 0.0
        %565 = vmatpush.msra.mxu0 0.0
        %566 = vmatpush.msra.mxu0 0.0
        %567 = vmatpush.msra.mxu0 0.0
        %568 = vmatpush.msra.mxu0 0.0
        %569 = vmatpush.msra.mxu0 %v553
        %570 = vmatpush.msra.mxu0 %v552
        %571 = vmatpush.msra.mxu0 %v551
        %572 = vmatpush.msra.mxu0 %v550
        %573 = vmatmul.f32.gmra.mxu0 %v555
        %v574 = vpop.f32.mrf.mxu0
        %v575 = vadd.f32 0.0, %v574
        %576 = vdwg.mxu0
        %v577 = vadd.f32 %v549, %v575
        %s578 = scalar_lea.vmem %s6, 32
        %v579 = vld [vmem:[%s578] sm:$0xff]
        %v580 = vld [vmem:[%s578 + $0x8] sm:$0xff]
        %v581 = vld [vmem:[%s578 + $0x10] sm:$0xff]
        %v582 = vld [vmem:[%s578 + $0x18] sm:$0xff]
        %v583 = vrot.slane %v547, 1
        %v584 = vsel %vm401, %v583, 0
        %586 = vmatpush.msra.mxu0 0.0
        %587 = vmatpush.msra.mxu0 0.0
        %588 = vmatpush.msra.mxu0 0.0
        %589 = vmatpush.msra.mxu0 0.0
        %590 = vmatpush.msra.mxu0 0.0
        %591 = vmatpush.msra.mxu0 0.0
        %592 = vmatpush.msra.mxu0 0.0
        %593 = vmatpush.msra.mxu0 0.0
        %594 = vmatpush.msra.mxu0 0.0
        %595 = vmatpush.msra.mxu0 0.0
        %596 = vmatpush.msra.mxu0 0.0
        %597 = vmatpush.msra.mxu0 0.0
        %598 = vmatpush.msra.mxu0 %v582
        %599 = vmatpush.msra.mxu0 %v581
        %600 = vmatpush.msra.mxu0 %v580
        %601 = vmatpush.msra.mxu0 %v579
        %602 = vmatmul.f32.gmra.mxu0 %v584
        %v603 = vpop.f32.mrf.mxu0
        %v604 = vadd.f32 0.0, %v603
        %605 = vdwg.mxu0
        %v606 = vadd.f32 %v577, %v604
        %v607 = vmax.f32 %v606, 0.0
        %v608 = vld [vmem:[%s8] sm:$0xff]
        %v609 = vld [vmem:[%s8 + $0x8] sm:$0xff]
        %v610 = vld [vmem:[%s8 + $0x10] sm:$0xff]
        %v611 = vld [vmem:[%s8 + $0x18] sm:$0xff]
        %v612 = vld [vmem:[%s8 + $0x20] sm:$0xff]
        %v613 = vld [vmem:[%s8 + $0x28] sm:$0xff]
        %v614 = vld [vmem:[%s8 + $0x30] sm:$0xff]
        %v615 = vld [vmem:[%s8 + $0x38] sm:$0xff]
        %v616 = vld [vmem:[%s9] sm:$0x1]
        %v618 = vsel %vm467, %v607, 0
        %620 = vmatpush.msra.mxu0 0.0
        %621 = vmatpush.msra.mxu0 0.0
        %622 = vmatpush.msra.mxu0 0.0
        %623 = vmatpush.msra.mxu0 0.0
        %624 = vmatpush.msra.mxu0 0.0
        %625 = vmatpush.msra.mxu0 0.0
        %626 = vmatpush.msra.mxu0 0.0
        %627 = vmatpush.msra.mxu0 0.0
        %628 = vmatpush.msra.mxu0 %v615
        %629 = vmatpush.msra.mxu0 %v614
        %630 = vmatpush.msra.mxu0 %v613
        %631 = vmatpush.msra.mxu0 %v612
        %632 = vmatpush.msra.mxu0 %v611
        %633 = vmatpush.msra.mxu0 %v610
        %634 = vmatpush.msra.mxu0 %v609
        %635 = vmatpush.msra.mxu0 %v608
        %636 = vmatmul.f32.gmra.mxu0 %v618
        %v637 = vpop.f32.mrf.mxu0
        %v638 = vadd.f32 %v616, %v637
        %639 = vdwg.mxu0
        %vm640 = vcmask 32768
        %641 = vst.msk [vmem:[%s366] sm:$0x1] %vm640, %v638
        %s642 = sand.u32 %s252, 1
        %s643 = scalar_lea.sflag [#allocation3], %s642
        %s644 = sand.u32 %s252, 1
        %s645 = scalar_lea.vmem [#allocation2], %s644
        // Predicated region
        $region61: #{tpu_custom_call.1} parent=59 // pred_check
          %p646 = pneg %p262
        $region62: #{tpu_custom_call.1} parent=59 // pred_check_branch
          %648 = sbr.rel (%p646) target = $region64
        $region63: #{tpu_custom_call.1} parent=59 // pred_region
          %650 = vsyncadd %s643, 0
          %s651 = scalar_lea.hbm %s10, %s24
          %s653 = sshll.u32 %s645, 4
          %s654 = int_to_ptr.vmem [resolvable:$true] %s653
          %s655 = sshll.u32 %s651, 4
          %s656 = int_to_ptr.hbm [resolvable:$true] %s655
          %658 = dma.vmem_to_hbm [thread:$0]  %s654, 16, %s656, %s643
        $region64: #{tpu_custom_call.1} parent=59 // pred_fallthru
          _
      $region60: #{tpu_custom_call.1} parent=5 // pred_fallthru
        _
      %p659 = scmp.le.s32.totalorder 2, %s19
      // Predicated region
      $region65: #{tpu_custom_call.1} parent=5 // pred_check
        %p660 = pneg %p659
      $region66: #{tpu_custom_call.1} parent=5 // pred_check_branch
        %662 = sbr.rel (%p660) target = $region68
      $region67: #{tpu_custom_call.1} parent=5 // pred_region
        %s663 = ssub.s32 %s19, 2
        // Predicated region
        $region69: #{tpu_custom_call.1} parent=67 // pred_check
          %p664 = pneg %p268
        $region70: #{tpu_custom_call.1} parent=67 // pred_check_branch
          %666 = sbr.rel (%p664) target = $region72
        $region71: #{tpu_custom_call.1} parent=67 // pred_region
          %s667 = sand.u32 %s253, 1
          %s668 = scalar_lea.sflag [#allocation3], %s667
          %s669 = sand.u32 %s253, 1
          %s670 = scalar_lea.vmem [#allocation2], %s669
          %672 = dma.done %s668, 16
        $region72: #{tpu_custom_call.1} parent=67 // pred_fallthru
          _
      $region68: #{tpu_custom_call.1} parent=5 // pred_fallthru
        _
    $region6: #{tpu_custom_call.1} parent=1 // loop_footer
      %s23 = sadd.s32 1, %s19
    $region7: #{tpu_custom_call.1} parent=1 // loop_footer_branch
      %18 = sbr.rel target = $region3
    $region8: #{tpu_custom_call.1} parent=1 // loop_exit
      _
    %673 = vsyncpa [#allocation3], 1
    %s674 = scalar_lea.sflag [#allocation3], 1
    %675 = vsyncpa %s674, 1

</llo_original>
